<compile_context>
chip_gen: v6e
topology: v6e:2x2x1
jax: 0.10.0
libtpu: 0.0.40
codegen_flags: <defaults>
</compile_context>

<pallas_src>
import functools

import jax
import jax.numpy as jnp
from jax import lax
from jax.experimental import pallas as pl
from jax.experimental.pallas import tpu as pltpu


def _round_up(x, m):
    return ((x + m - 1) // m) * m


def _make_loop_kernel(k, stride, wq, p_out, cin_p, cout_p):
    """k*k MXU matmuls accumulated in f32 (used when Cin is large)."""

    def kernel(x_ref, w_ref, bias_ref, o_ref):
        # x_ref:    (1, s*s*cin_p, l_pad)   phase-decomposed, flattened input
        # w_ref:    (k*k, cout_p, cin_p)    BN-scale-folded weights (resident)
        # bias_ref: (cout_p, 1)             folded BN bias (resident)
        # o_ref:    (1, cout_p, p_out)      lane-dense "wide" conv output
        acc = jnp.zeros((cout_p, p_out), jnp.float32)
        for kh in range(k):
            for kw in range(k):
                ph = (kh % stride) * stride + (kw % stride)   # phase plane
                off = (kh // stride) * wq + (kw // stride)    # static lane shift
                cs = ph * cin_p
                acc += jnp.dot(
                    w_ref[kh * k + kw],                       # (cout_p, cin_p)
                    x_ref[0, cs:cs + cin_p, off:off + p_out], # (cin_p, p_out)
                    preferred_element_type=jnp.float32)
        y = acc + bias_ref[...]
        o_ref[0] = jnp.maximum(y, 0.1 * y).astype(o_ref.dtype)  # LeakyReLU(0.1)

    return kernel


def _make_stacked_kernel(k, stride, wq, p_out, cin_p, cout_p):
    """Single stacked matmul (used when Cin_p*k*k is small: better MXU util)."""

    def kernel(x_ref, w_ref, bias_ref, o_ref):
        # w_ref: (cout_p, k*k*cin_p) stacked, BN-scale-folded weights (resident)
        pieces = []
        for kh in range(k):
            for kw in range(k):
                ph = (kh % stride) * stride + (kw % stride)
                off = (kh // stride) * wq + (kw // stride)
                cs = ph * cin_p
                pieces.append(x_ref[0, cs:cs + cin_p, off:off + p_out])
        patches = pieces[0] if len(pieces) == 1 else jnp.concatenate(pieces, axis=0)
        y = jnp.dot(w_ref[...], patches,
                    preferred_element_type=jnp.float32) + bias_ref[...]
        o_ref[0] = jnp.maximum(y, 0.1 * y).astype(o_ref.dtype)

    return kernel


@functools.partial(jax.jit,
                   static_argnames=("kernel_size", "stride", "compute_dtype"))
def basic_conv_forward(x, weight, gamma, beta, running_mean, running_var,
                       kernel_size, stride=1, compute_dtype=jnp.float32):
    """x: (N, Cin, H, W) f32; weight: (Cout, Cin, k, k) PyTorch OIHW. Returns NCHW."""
    eps = 1e-5
    n, cin, h, w = x.shape
    cout = weight.shape[0]
    k = kernel_size
    s = stride
    pad = k // 2
    hp, wp = h + 2 * pad, w + 2 * pad
    h_out = (hp - k) // s + 1
    w_out = (wp - k) // s + 1

    cin_p = _round_up(cin, 8)     # sublane alignment for matmul operands
    cout_p = _round_up(cout, 8)   # sublane alignment for the output tile

    # Phase decomposition: x_phase[rh, rw][ci, i, j] = x_pad[ci, i*s+rh, j*s+rw].
    # Output position (oh, ow) then reads phase (kh%s, kw%s) at the STATIC
    # row-major lane offset (kh//s)*Wq + (kw//s) relative to lane oh*Wq + ow.
    hq = -(-hp // s)              # ceil(hp / s)
    wq = -(-wp // s)
    q_max = (k - 1) // s
    halo = q_max * wq + q_max                         # max static lane shift
    p_out = _round_up(h_out * wq, 128)                # lane-dense output width
    l_pad = _round_up(max(hq * wq, p_out + halo), 128)

    # Wrapper-side data movement is one pass over the padded input: O(N*Cin*Hp*Wp).
    x_pad = jnp.pad(
        x, ((0, 0), (0, cin_p - cin),
            (pad, pad + (hq * s - hp)), (pad, pad + (wq * s - wp))))
    xph = x_pad.reshape(n, cin_p, hq, s, wq, s).transpose(0, 3, 5, 1, 2, 4)
    xph = xph.reshape(n, s * s * cin_p, hq * wq)
    xph = jnp.pad(xph, ((0, 0), (0, 0), (0, l_pad - hq * wq)))
    xph = xph.astype(compute_dtype)

    # Fold BatchNorm (running stats) into weights + bias.
    scale = gamma / jnp.sqrt(running_var + eps)
    bias = beta - running_mean * scale
    w_scaled = weight.astype(jnp.float32) * scale[:, None, None, None]
    # (Cout, Cin, kh, kw) -> (k*k, cout_p, cin_p), kk index = kh*k + kw.
    w_kk = jnp.transpose(w_scaled, (2, 3, 0, 1)).reshape(k * k, cout, cin)
    w_kk = jnp.pad(w_kk, ((0, 0), (0, cout_p - cout), (0, cin_p - cin)))
    bias_col = jnp.pad(bias.astype(jnp.float32), (0, cout_p - cout)).reshape(cout_p, 1)

    stacked = cin_p * k * k <= 256
    if stacked:
        # Column order kk*cin_p + ci matches the in-kernel concatenation order.
        w_arg = jnp.transpose(w_kk, (1, 0, 2)).reshape(
            cout_p, k * k * cin_p).astype(compute_dtype)
        w_spec = pl.BlockSpec((cout_p, k * k * cin_p), lambda b: (0, 0))
        kernel = _make_stacked_kernel(k, s, wq, p_out, cin_p, cout_p)
    else:
        w_arg = w_kk.astype(compute_dtype)
        w_spec = pl.BlockSpec((k * k, cout_p, cin_p), lambda b: (0, 0, 0))
        kernel = _make_loop_kernel(k, s, wq, p_out, cin_p, cout_p)

    bytes_per = 2 if compute_dtype == jnp.bfloat16 else 4
    in_block = s * s * cin_p * l_pad * bytes_per
    out_block = cout_p * p_out * 4
    w_bytes = k * k * cout_p * cin_p * bytes_per
    patch_bytes = k * k * cin_p * p_out * bytes_per if stacked else 0
    vmem_needed = (2 * in_block + 2 * out_block + w_bytes + patch_bytes
                   + cout_p * 128 * 4 + (2 << 20))
    vmem_limit = int(min(max(vmem_needed, 16 << 20), 64 << 20))

    cost = pl.CostEstimate(
        flops=2 * n * cout_p * cin_p * k * k * p_out,
        transcendentals=0,
        bytes_accessed=n * in_block + w_bytes + n * out_block)

    out_wide = pl.pallas_call(
        kernel,
        out_shape=jax.ShapeDtypeStruct((n, cout_p, p_out), jnp.float32),
        grid_spec=pltpu.PrefetchScalarGridSpec(
            num_scalar_prefetch=0,
            grid=(n,),
            in_specs=[
                pl.BlockSpec((1, s * s * cin_p, l_pad), lambda b: (b, 0, 0)),
                w_spec,
                pl.BlockSpec((cout_p, 1), lambda b: (0, 0)),
            ],
            out_specs=pl.BlockSpec((1, cout_p, p_out), lambda b: (b, 0, 0)),
        ),
        compiler_params=pltpu.CompilerParams(
            dimension_semantics=("parallel",),
            vmem_limit_bytes=vmem_limit),
        cost_estimate=cost,
    )(xph, w_arg, bias_col)

    # Crop padding channels / junk columns -> NCHW (no stride subsampling needed:
    # the kernel already computed exactly the strided output positions).
    wide = out_wide[:, :cout, :h_out * wq].reshape(n, cout, h_out, wq)
    return wide[:, :, :, :w_out]


def _reference(x, weight, gamma, beta, running_mean, running_var, k, stride):
    eps = 1e-5
    pad = k // 2
    y = lax.conv_general_dilated(
        x, weight, window_strides=(stride, stride),
        padding=[(pad, pad), (pad, pad)],
        dimension_numbers=("NCHW", "OIHW", "NCHW"),
        precision=lax.Precision.HIGHEST)
    scale = (gamma / jnp.sqrt(running_var + eps)).reshape(1, -1, 1, 1)
    b = (beta - running_mean * gamma / jnp.sqrt(running_var + eps)).reshape(1, -1, 1, 1)
    y = y * scale + b
    return jnp.where(y >= 0, y, 0.1 * y)


def _run_case(name, key, n, cin, h, w, cout, k, stride, compute_dtype, atol, rtol):
    kx, kw_, kg, kb, km, kv = jax.random.split(key, 6)
    x = jax.random.normal(kx, (n, cin, h, w), dtype=jnp.float32)
    weight = 0.1 * jax.random.normal(kw_, (cout, cin, k, k), dtype=jnp.float32)
    gamma = 1.0 + 0.1 * jax.random.normal(kg, (cout,), dtype=jnp.float32)
    beta = 0.1 * jax.random.normal(kb, (cout,), dtype=jnp.float32)
    rmean = 0.1 * jax.random.normal(km, (cout,), dtype=jnp.float32)
    rvar = jnp.abs(1.0 + 0.1 * jax.random.normal(kv, (cout,), dtype=jnp.float32))

    out = basic_conv_forward(x, weight, gamma, beta, rmean, rvar,
                             kernel_size=k, stride=stride,
                             compute_dtype=compute_dtype)
    out = jax.block_until_ready(out)
    ref = _reference(x, weight, gamma, beta, rmean, rvar, k, stride)
    assert out.shape == ref.shape, (name, out.shape, ref.shape)
    err = float(jnp.max(jnp.abs(out - ref)))
    assert jnp.allclose(out, ref, atol=atol, rtol=rtol), (name, err)


if __name__ == "__main__":
    root = jax.random.PRNGKey(0)
    keys = jax.random.split(root, 5)

    # 3x3, stride 1 (stacked-matmul path), f32.
    _run_case("3x3_s1", keys[0], 2, 4, 16, 16, 8, 3, 1, jnp.float32, 1e-4, 1e-4)
    # 3x3, stride 2 downsample (phase decomposition, compute-exact), f32.
    _run_case("3x3_s2", keys[1], 2, 4, 16, 16, 8, 3, 2, jnp.float32, 1e-4, 1e-4)
    # 1x1 pointwise conv, f32.
    _run_case("1x1_s1", keys[2], 2, 4, 16, 16, 8, 1, 1, jnp.float32, 1e-4, 1e-4)
    # Larger Cin exercises the k*k accumulation-loop path, f32.
    _run_case("3x3_s1_loop", keys[3], 2, 32, 16, 16, 16, 3, 1, jnp.float32, 1e-3, 1e-3)
    # bf16 matmul operands (recommended on v6e/v7x), f32 accumulation/epilogue.
    _run_case("3x3_s1_bf16", keys[4], 2, 4, 16, 16, 8, 3, 1, jnp.bfloat16, 5e-2, 5e-2)

    print("KERNEL_OK")
</pallas_src>

<mosaic_0001>
module attributes {stable_mosaic.version = 11 : i64} {
  func.func @kernel(%arg0: i32, %arg1: memref<1x8x512xf32, #tpu.memory_space<vmem>>, %arg2: memref<8x72xf32, #tpu.memory_space<vmem>>, %arg3: memref<8x1xf32, #tpu.memory_space<vmem>>, %arg4: memref<1x8x384xf32, #tpu.memory_space<vmem>>) attributes {dimension_semantics = [#tpu.dimension_semantics<parallel>], iteration_bounds = array<i64: 2>, scalar_prefetch = 0 : i64, scratch_operands = 0 : i64, tpu.core_type = #tpu.core_type<tc>, window_params = [{transform_indices = @transform_0, window_bounds = array<i64: 1, 8, 512>}, {pipeline_mode = #tpu.pipeline_mode<synchronous>, transform_indices = @transform_1, window_bounds = array<i64: 8, 72>}, {pipeline_mode = #tpu.pipeline_mode<synchronous>, transform_indices = @transform_2, window_bounds = array<i64: 8, 1>}, {transform_indices = @transform_3, window_bounds = array<i64: 1, 8, 384>}]} {
    %c0 = arith.constant 0 : index
    %c0_0 = arith.constant 0 : index
    %c0_1 = arith.constant 0 : index
    %0 = vector.load %arg1[%c0, %c0_0, %c0_1] : memref<1x8x512xf32, #tpu.memory_space<vmem>>, vector<1x8x384xf32>
    %1 = vector.shape_cast %0 : vector<1x8x384xf32> to vector<8x384xf32>
    %c0_2 = arith.constant 0 : index
    %c0_3 = arith.constant 0 : index
    %c1 = arith.constant 1 : index
    %2 = vector.load %arg1[%c0_2, %c0_3, %c1] : memref<1x8x512xf32, #tpu.memory_space<vmem>>, vector<1x8x384xf32>
    %3 = vector.shape_cast %2 : vector<1x8x384xf32> to vector<8x384xf32>
    %c0_4 = arith.constant 0 : index
    %c0_5 = arith.constant 0 : index
    %c2 = arith.constant 2 : index
    %4 = vector.load %arg1[%c0_4, %c0_5, %c2] : memref<1x8x512xf32, #tpu.memory_space<vmem>>, vector<1x8x384xf32>
    %5 = vector.shape_cast %4 : vector<1x8x384xf32> to vector<8x384xf32>
    %c0_6 = arith.constant 0 : index
    %c0_7 = arith.constant 0 : index
    %c18 = arith.constant 18 : index
    %6 = vector.load %arg1[%c0_6, %c0_7, %c18] : memref<1x8x512xf32, #tpu.memory_space<vmem>>, vector<1x8x384xf32>
    %7 = vector.shape_cast %6 : vector<1x8x384xf32> to vector<8x384xf32>
    %c0_8 = arith.constant 0 : index
    %c0_9 = arith.constant 0 : index
    %c19 = arith.constant 19 : index
    %8 = vector.load %arg1[%c0_8, %c0_9, %c19] : memref<1x8x512xf32, #tpu.memory_space<vmem>>, vector<1x8x384xf32>
    %9 = vector.shape_cast %8 : vector<1x8x384xf32> to vector<8x384xf32>
    %c0_10 = arith.constant 0 : index
    %c0_11 = arith.constant 0 : index
    %c20 = arith.constant 20 : index
    %10 = vector.load %arg1[%c0_10, %c0_11, %c20] : memref<1x8x512xf32, #tpu.memory_space<vmem>>, vector<1x8x384xf32>
    %11 = vector.shape_cast %10 : vector<1x8x384xf32> to vector<8x384xf32>
    %c0_12 = arith.constant 0 : index
    %c0_13 = arith.constant 0 : index
    %c36 = arith.constant 36 : index
    %12 = vector.load %arg1[%c0_12, %c0_13, %c36] : memref<1x8x512xf32, #tpu.memory_space<vmem>>, vector<1x8x384xf32>
    %13 = vector.shape_cast %12 : vector<1x8x384xf32> to vector<8x384xf32>
    %c0_14 = arith.constant 0 : index
    %c0_15 = arith.constant 0 : index
    %c37 = arith.constant 37 : index
    %14 = vector.load %arg1[%c0_14, %c0_15, %c37] : memref<1x8x512xf32, #tpu.memory_space<vmem>>, vector<1x8x384xf32>
    %15 = vector.shape_cast %14 : vector<1x8x384xf32> to vector<8x384xf32>
    %c0_16 = arith.constant 0 : index
    %c0_17 = arith.constant 0 : index
    %c38 = arith.constant 38 : index
    %16 = vector.load %arg1[%c0_16, %c0_17, %c38] : memref<1x8x512xf32, #tpu.memory_space<vmem>>, vector<1x8x384xf32>
    %17 = vector.shape_cast %16 : vector<1x8x384xf32> to vector<8x384xf32>
    %18 = tpu.concatenate %1, %3, %5, %7, %9, %11, %13, %15, %17 in 0 : vector<8x384xf32>, vector<8x384xf32>, vector<8x384xf32>, vector<8x384xf32>, vector<8x384xf32>, vector<8x384xf32>, vector<8x384xf32>, vector<8x384xf32>, vector<8x384xf32> -> vector<72x384xf32>
    %c0_18 = arith.constant 0 : index
    %c0_19 = arith.constant 0 : index
    %19 = vector.load %arg2[%c0_18, %c0_19] : memref<8x72xf32, #tpu.memory_space<vmem>>, vector<8x72xf32>
    %cst = arith.constant dense<0.000000e+00> : vector<8x384xf32>
    %20 = tpu.matmul %19, %18, %cst {dimension_numbers = #tpu.dot_dimension_numbers<[1], [0], [0], [1], [0, 0, 1, 1], [], []>} : vector<8x72xf32>, vector<72x384xf32>, vector<8x384xf32> -> vector<8x384xf32>
    %c0_20 = arith.constant 0 : index
    %c0_21 = arith.constant 0 : index
    %21 = vector.load %arg3[%c0_20, %c0_21] : memref<8x1xf32, #tpu.memory_space<vmem>>, vector<8x1xf32>
    %22 = vector.broadcast %21 : vector<8x1xf32> to vector<8x384xf32>
    %23 = arith.addf %20, %22 : vector<8x384xf32>
    %cst_22 = arith.constant 1.000000e-01 : f32
    %24 = vector.broadcast %cst_22 : f32 to vector<8x384xf32>
    %25 = arith.mulf %24, %23 : vector<8x384xf32>
    %26 = arith.maximumf %23, %25 : vector<8x384xf32>
    %c0_23 = arith.constant 0 : index
    %c0_24 = arith.constant 0 : index
    %c0_25 = arith.constant 0 : index
    %27 = vector.load %arg4[%c0_23, %c0_24, %c0_25] : memref<1x8x384xf32, #tpu.memory_space<vmem>>, vector<1x8x384xf32>
    %28 = vector.shape_cast %27 : vector<1x8x384xf32> to vector<8x384xf32>
    %29 = vector.shape_cast %26 : vector<8x384xf32> to vector<1x8x384xf32>
    tpu.vector_store %arg4[%c0_23, %c0_24, %c0_25], %29 {strides = array<i32>} : memref<1x8x384xf32, #tpu.memory_space<vmem>>, vector<1x8x384xf32>,
    return
  }
  func.func @transform_0(%arg0: i32) -> (i32, i32, i32) {
    %c0_i32 = arith.constant 0 : i32
    %c0_i32_0 = arith.constant 0 : i32
    %c0_i32_1 = arith.constant 0 : i32
    return %arg0, %c0_i32, %c0_i32_0 : i32, i32, i32
  }
  func.func @transform_1(%arg0: i32) -> (i32, i32) {
    %c0_i32 = arith.constant 0 : i32
    %c0_i32_0 = arith.constant 0 : i32
    %c0_i32_1 = arith.constant 0 : i32
    return %c0_i32, %c0_i32_0 : i32, i32
  }
  func.func @transform_2(%arg0: i32) -> (i32, i32) {
    %c0_i32 = arith.constant 0 : i32
    %c0_i32_0 = arith.constant 0 : i32
    %c0_i32_1 = arith.constant 0 : i32
    return %c0_i32, %c0_i32_0 : i32, i32
  }
  func.func @transform_3(%arg0: i32) -> (i32, i32, i32) {
    %c0_i32 = arith.constant 0 : i32
    %c0_i32_0 = arith.constant 0 : i32
    %c0_i32_1 = arith.constant 0 : i32
    return %arg0, %c0_i32, %c0_i32_0 : i32, i32, i32
  }
}

</mosaic_0001>

<llo_original>
// kernel: basic_conv_forward.1
$region0: #{basic_conv_forward.1}
  #allocation0 [shape = 'u32[]', space=smem, size = 0x4, offset = 0x4, fixed_abs, tag = 'smem constant byte address 0x4 - core index']
  #allocation1 [shape = 'u32[144,128]{1,0:T(1,128)}', space=vmem, size = 0x12000, scoped, tag = 'internal scratch']
  %s0 = inlined_call_operand.vmem [shape: f32[2,8,512], index: 0, kind: input, shape index: {}]
  %s1 = inlined_call_operand.vmem [shape: f32[8,72], index: 1, kind: input, shape index: {}]
  %s2 = inlined_call_operand.vmem [shape: f32[8,1], index: 2, kind: input, shape index: {}]
  %s3 = inlined_call_operand.vmem [shape: f32[2,8,384], index: 3, kind: output, shape index: {}]
  %s4 = sld [smem:[#allocation0]]
  $region45: #{basic_conv_forward.1} parent=0
    _
  %s6 = ssub.s32 1, %s4
  %s7 = scalar_select 0, %s6, %s4
  loop: start=0, step=1, limit=4
  $region2: #{basic_conv_forward.1} parent=0 // loop_pre_header
    _
  $region3: #{basic_conv_forward.1} parent=0 // loop_header
    %s9 = sphi 0, %s13
    %p10 = scmp.ge.s32.totalorder %s9, 4
    %s19 = sphi 0, %s21
    %s22 = sphi 0, %s19
    %s23 = sphi 0, %s22
    %s39 = sphi 0, %s23
    %s43 = sphi 0, %s43
    %s45 = sphi 0, %s43
    %s46 = sphi 0, %s45
    %s60 = sphi 0, %s46
    %s64 = sphi 0, %s64
    %s66 = sphi 0, %s64
    %s67 = sphi 0, %s66
    %s81 = sphi 0, %s67
    %s87 = sphi 0, %s89
    %s90 = sphi 0, %s87
    %s91 = sphi 0, %s90
    %s107 = sphi 0, %s91
  $region4: #{basic_conv_forward.1} parent=0 // loop_header_branch
    %12 = sbr.rel (%p10) target = $region8
  $region5: #{basic_conv_forward.1} parent=0 // loop_body
    %s14 = ssub.s32 %s9, 1
    %s15 = ssub.s32 %s9, 2
    %s16 = sadd.s32 %s9, 1
    %s17 = ssub.s32 %s9, %s16
    %p18 = scmp.eq.s32.totalorder %s17, 0
    %s20 = sadd.s32 %s19, 1
    %s21 = scalar_select %p18, %s19, %s20
    %p24 = pneg %p18
    %p25 = scmp.eq.s32.totalorder %s9, 1
    %p26 = por %p24, %p25
    %p27 = scmp.ne.s32.totalorder %s19, %s22
    %p28 = scmp.eq.s32.totalorder %s9, 0
    %p29 = por %p27, %p28
    %p30 = scmp.ne.s32.totalorder %s19, %s22
    %p31 = scmp.eq.s32.totalorder %s14, 1
    %p32 = por %p30, %p31
    %p33 = scmp.ne.s32.totalorder %s22, %s23
    %p34 = scmp.eq.s32.totalorder %s14, 0
    %p35 = por %p33, %p34
    %p36 = scmp.ne.s32.totalorder %s22, %s23
    %p37 = scmp.eq.s32.totalorder %s15, 1
    %p38 = por %p36, %p37
    %p40 = scmp.ne.s32.totalorder %s23, %s39
    %p41 = scmp.eq.s32.totalorder %s15, 0
    %p42 = por %p40, %p41
    %s44 = sadd.s32 %s43, 1
    %p47 = scmp.eq.s32.totalorder %s9, 1
    %p48 = scmp.ne.s32.totalorder %s43, %s45
    %p49 = scmp.eq.s32.totalorder %s9, 0
    %p50 = por %p48, %p49
    %p51 = scmp.ne.s32.totalorder %s43, %s45
    %p52 = scmp.eq.s32.totalorder %s14, 1
    %p53 = por %p51, %p52
    %p54 = scmp.ne.s32.totalorder %s45, %s46
    %p55 = scmp.eq.s32.totalorder %s14, 0
    %p56 = por %p54, %p55
    %p57 = scmp.ne.s32.totalorder %s45, %s46
    %p58 = scmp.eq.s32.totalorder %s15, 1
    %p59 = por %p57, %p58
    %p61 = scmp.ne.s32.totalorder %s46, %s60
    %p62 = scmp.eq.s32.totalorder %s15, 0
    %p63 = por %p61, %p62
    %s65 = sadd.s32 %s64, 1
    %p68 = scmp.eq.s32.totalorder %s9, 1
    %p69 = scmp.ne.s32.totalorder %s64, %s66
    %p70 = scmp.eq.s32.totalorder %s9, 0
    %p71 = por %p69, %p70
    %p72 = scmp.ne.s32.totalorder %s64, %s66
    %p73 = scmp.eq.s32.totalorder %s14, 1
    %p74 = por %p72, %p73
    %p75 = scmp.ne.s32.totalorder %s66, %s67
    %p76 = scmp.eq.s32.totalorder %s14, 0
    %p77 = por %p75, %p76
    %p78 = scmp.ne.s32.totalorder %s66, %s67
    %p79 = scmp.eq.s32.totalorder %s15, 1
    %p80 = por %p78, %p79
    %p82 = scmp.ne.s32.totalorder %s67, %s81
    %p83 = scmp.eq.s32.totalorder %s15, 0
    %p84 = por %p82, %p83
    %s85 = ssub.s32 %s9, %s16
    %p86 = scmp.eq.s32.totalorder %s85, 0
    %s88 = sadd.s32 %s87, 1
    %s89 = scalar_select %p86, %s87, %s88
    %p92 = pneg %p86
    %p93 = scmp.eq.s32.totalorder %s9, 1
    %p94 = por %p92, %p93
    %p95 = scmp.ne.s32.totalorder %s87, %s90
    %p96 = scmp.eq.s32.totalorder %s9, 0
    %p97 = por %p95, %p96
    %p98 = scmp.ne.s32.totalorder %s87, %s90
    %p99 = scmp.eq.s32.totalorder %s14, 1
    %p100 = por %p98, %p99
    %p101 = scmp.ne.s32.totalorder %s90, %s91
    %p102 = scmp.eq.s32.totalorder %s14, 0
    %p103 = por %p101, %p102
    %p104 = scmp.ne.s32.totalorder %s90, %s91
    %p105 = scmp.eq.s32.totalorder %s15, 1
    %p106 = por %p104, %p105
    %p108 = scmp.ne.s32.totalorder %s91, %s107
    %p109 = scmp.eq.s32.totalorder %s15, 0
    %p110 = por %p108, %p109
    %p111 = scmp.le.s32.totalorder 1, %s9
    %p112 = scmp.lt.s32.totalorder %s9, 3
    %p113 = pnand %p111, %p112
    %p114 = pneg %p113
    // Predicated region
    $region9: #{basic_conv_forward.1} parent=5 // pred_check
      _
    $region10: #{basic_conv_forward.1} parent=5 // pred_check_branch
      %116 = sbr.rel (%p113) target = $region12
    $region11: #{basic_conv_forward.1} parent=5 // pred_region
      %s117 = ssub.s32 %s9, 1
      // Predicated region
      $region13: #{basic_conv_forward.1} parent=11 // pred_check
        %p118 = pneg %p56
      $region14: #{basic_conv_forward.1} parent=11 // pred_check_branch
        %120 = sbr.rel (%p118) target = $region16
      $region15: #{basic_conv_forward.1} parent=11 // pred_region
        _
      $region16: #{basic_conv_forward.1} parent=11 // pred_fallthru
        _
      // Predicated region
      $region17: #{basic_conv_forward.1} parent=11 // pred_check
        %p121 = pneg %p77
      $region18: #{basic_conv_forward.1} parent=11 // pred_check_branch
        %123 = sbr.rel (%p121) target = $region20
      $region19: #{basic_conv_forward.1} parent=11 // pred_region
        _
      $region20: #{basic_conv_forward.1} parent=11 // pred_fallthru
        _
    $region12: #{basic_conv_forward.1} parent=5 // pred_fallthru
      _
    %p124 = scmp.lt.s32.totalorder %s9, 2
    // Predicated region
    $region21: #{basic_conv_forward.1} parent=5 // pred_check
      %p125 = pneg %p124
    $region22: #{basic_conv_forward.1} parent=5 // pred_check_branch
      %127 = sbr.rel (%p125) target = $region24
    $region23: #{basic_conv_forward.1} parent=5 // pred_region
      // Predicated region
      $region25: #{basic_conv_forward.1} parent=23 // pred_check
        %p128 = pneg %p29
      $region26: #{basic_conv_forward.1} parent=23 // pred_check_branch
        %130 = sbr.rel (%p128) target = $region28
      $region27: #{basic_conv_forward.1} parent=23 // pred_region
        %p131 = scmp.lt.s32.totalorder %s9, 1
        %s132 = scalar_select %p131, %s9, 1
        %s133 = smul.addr %s132, 4
        %s134 = smul.addr %s133, 8
        %s135 = scalar_lea.vmem %s0, %s134
      $region28: #{basic_conv_forward.1} parent=23 // pred_fallthru
        _
    $region24: #{basic_conv_forward.1} parent=5 // pred_fallthru
      _
    %p136 = scmp.le.s32.totalorder 1, %s9
    %p137 = scmp.lt.s32.totalorder %s9, 3
    %p138 = pnand %p136, %p137
    %p139 = pneg %p138
    // Predicated region
    $region29: #{basic_conv_forward.1} parent=5 // pred_check
      _
    $region30: #{basic_conv_forward.1} parent=5 // pred_check_branch
      %141 = sbr.rel (%p138) target = $region32
    $region31: #{basic_conv_forward.1} parent=5 // pred_region
      %s142 = ssub.s32 %s9, 1
      %p143 = scmp.lt.s32.totalorder %s14, 1
      %s144 = scalar_select %p143, %s14, 1
      %s145 = smul.addr %s144, 4
      %s146 = smul.addr %s145, 8
      %s147 = scalar_lea.vmem %s0, %s146
      %p148 = pneg %p35
      %p149 = pneg %p32
      %p150 = pneg %p56
      %p151 = pneg %p53
      %p152 = pneg %p77
      %p153 = pneg %p74
      %p154 = pneg %p103
      %p155 = pneg %p100
      %p156 = scmp.lt.s32.totalorder %s14, 1
      %s157 = scalar_select %p156, %s14, 1
      %s158 = smul.addr %s157, 3
      %s159 = smul.addr %s158, 8
      %s160 = scalar_lea.vmem %s3, %s159
      %p161 = scmp.lt.s32.totalorder %s14, 1
      %s162 = scalar_select %p161, %s14, 1
      %s163 = smul.addr %s162, 4
      %s164 = smul.addr %s163, 8
      %s165 = scalar_lea.vmem %s0, %s164
      %p166 = scmp.lt.s32.totalorder %s14, 1
      %s167 = scalar_select %p166, %s14, 1
      %s168 = smul.addr %s167, 3
      %s169 = smul.addr %s168, 8
      %s170 = scalar_lea.vmem %s3, %s169
      %v171 = vld [vmem:[%s165] sm:$0xff]
      %v172 = vld [vmem:[%s165 + $0x8] sm:$0xff]
      %v173 = vld [vmem:[%s165 + $0x10] sm:$0xff]
      %v174 = vld [vmem:[%s165] sm:$0xff]
      %v175 = vld [vmem:[%s165 + $0x8] sm:$0xff]
      %v176 = vld [vmem:[%s165 + $0x10] sm:$0xff]
      %v177 = vld [vmem:[%s165 + $0x18] sm:$0xff]
      %182 = vrot.lane.b32.xlu0 %v174, 127
      %v183 = vpop.permute.xlu0 %182
      %184 = vrot.lane.b32.xlu0 %v175, 127
      %v185 = vpop.permute.xlu0 %184
      %186 = vrot.lane.b32.xlu0 %v176, 127
      %v187 = vpop.permute.xlu0 %186
      %188 = vrot.lane.b32.xlu0 %v177, 127
      %v189 = vpop.permute.xlu0 %188
      %vm190 = vcmask 1039360
      %v191 = vsel %vm190, %v183, %v185
      %v192 = vsel %vm190, %v185, %v187
      %v193 = vsel %vm190, %v187, %v189
      %197 = vrot.lane.b32.xlu0 %v174, 126
      %v198 = vpop.permute.xlu0 %197
      %199 = vrot.lane.b32.xlu0 %v175, 126
      %v200 = vpop.permute.xlu0 %199
      %201 = vrot.lane.b32.xlu0 %v176, 126
      %v202 = vpop.permute.xlu0 %201
      %203 = vrot.lane.b32.xlu0 %v177, 126
      %v204 = vpop.permute.xlu0 %203
      %vm205 = vcmask 1031168
      %v206 = vsel %vm205, %v198, %v200
      %v207 = vsel %vm205, %v200, %v202
      %v208 = vsel %vm205, %v202, %v204
      %212 = vrot.lane.b32.xlu0 %v174, 110
      %v213 = vpop.permute.xlu0 %212
      %214 = vrot.lane.b32.xlu0 %v175, 110
      %v215 = vpop.permute.xlu0 %214
      %216 = vrot.lane.b32.xlu0 %v176, 110
      %v217 = vpop.permute.xlu0 %216
      %218 = vrot.lane.b32.xlu0 %v177, 110
      %v219 = vpop.permute.xlu0 %218
      %vm220 = vcmask 900096
      %v221 = vsel %vm220, %v213, %v215
      %v222 = vsel %vm220, %v215, %v217
      %v223 = vsel %vm220, %v217, %v219
      %227 = vrot.lane.b32.xlu0 %v174, 109
      %v228 = vpop.permute.xlu0 %227
      %229 = vrot.lane.b32.xlu0 %v175, 109
      %v230 = vpop.permute.xlu0 %229
      %231 = vrot.lane.b32.xlu0 %v176, 109
      %v232 = vpop.permute.xlu0 %231
      %233 = vrot.lane.b32.xlu0 %v177, 109
      %v234 = vpop.permute.xlu0 %233
      %vm235 = vcmask 891904
      %v236 = vsel %vm235, %v228, %v230
      %v237 = vsel %vm235, %v230, %v232
      %v238 = vsel %vm235, %v232, %v234
      %242 = vrot.lane.b32.xlu0 %v174, 108
      %v243 = vpop.permute.xlu0 %242
      %244 = vrot.lane.b32.xlu0 %v175, 108
      %v245 = vpop.permute.xlu0 %244
      %246 = vrot.lane.b32.xlu0 %v176, 108
      %v247 = vpop.permute.xlu0 %246
      %248 = vrot.lane.b32.xlu0 %v177, 108
      %v249 = vpop.permute.xlu0 %248
      %vm250 = vcmask 883712
      %v251 = vsel %vm250, %v243, %v245
      %v252 = vsel %vm250, %v245, %v247
      %v253 = vsel %vm250, %v247, %v249
      %257 = vrot.lane.b32.xlu0 %v174, 92
      %v258 = vpop.permute.xlu0 %257
      %259 = vrot.lane.b32.xlu0 %v175, 92
      %v260 = vpop.permute.xlu0 %259
      %261 = vrot.lane.b32.xlu0 %v176, 92
      %v262 = vpop.permute.xlu0 %261
      %263 = vrot.lane.b32.xlu0 %v177, 92
      %v264 = vpop.permute.xlu0 %263
      %vm265 = vcmask 752640
      %v266 = vsel %vm265, %v258, %v260
      %v267 = vsel %vm265, %v260, %v262
      %v268 = vsel %vm265, %v262, %v264
      %272 = vrot.lane.b32.xlu0 %v174, 91
      %v273 = vpop.permute.xlu0 %272
      %274 = vrot.lane.b32.xlu0 %v175, 91
      %v275 = vpop.permute.xlu0 %274
      %276 = vrot.lane.b32.xlu0 %v176, 91
      %v277 = vpop.permute.xlu0 %276
      %278 = vrot.lane.b32.xlu0 %v177, 91
      %v279 = vpop.permute.xlu0 %278
      %vm280 = vcmask 744448
      %v281 = vsel %vm280, %v273, %v275
      %v282 = vsel %vm280, %v275, %v277
      %v283 = vsel %vm280, %v277, %v279
      %287 = vrot.lane.b32.xlu0 %v174, 90
      %v288 = vpop.permute.xlu0 %287
      %289 = vrot.lane.b32.xlu0 %v175, 90
      %v290 = vpop.permute.xlu0 %289
      %291 = vrot.lane.b32.xlu0 %v176, 90
      %v292 = vpop.permute.xlu0 %291
      %293 = vrot.lane.b32.xlu0 %v177, 90
      %v294 = vpop.permute.xlu0 %293
      %vm295 = vcmask 736256
      %v296 = vsel %vm295, %v288, %v290
      %v297 = vsel %vm295, %v290, %v292
      %v298 = vsel %vm295, %v292, %v294
      %v302 = vld [vmem:[%s1] sm:$0xff]
      %v303 = vld [vmem:[%s2] sm:$0xff]
      %305 = vset.pattern.permute.xlu0 0
      %306 = vperm.xlu0 %305, %v303
      %v307 = vpop.permute.xlu0 %306
      %vm309 = vcmask 588800
      %v311 = vsel %vm309, %v302, 0
      %313 = vmatprep.subr.mxu0 0.0
      %314 = vmatpush1.msra.mxu0 0.0
      %315 = vmatprep.subr.mxu0 0.0
      %316 = vmatpush1.msra.mxu0 0.0
      %317 = vmatprep.subr.mxu0 0.0
      %318 = vmatpush1.msra.mxu0 0.0
      %319 = vmatprep.subr.mxu0 0.0
      %320 = vmatpush1.msra.mxu0 0.0
      %321 = vmatprep.subr.mxu0 0.0
      %322 = vmatpush1.msra.mxu0 0.0
      %323 = vmatprep.subr.mxu0 0.0
      %324 = vmatpush1.msra.mxu0 0.0
      %325 = vmatprep.subr.mxu0 0.0
      %326 = vmatpush1.msra.mxu0 0.0
      %327 = vmatprep.subr.mxu0 %v297
      %328 = vmatpush1.msra.mxu0 %v296
      %329 = vmatprep.subr.mxu0 %v282
      %330 = vmatpush1.msra.mxu0 %v281
      %331 = vmatprep.subr.mxu0 %v267
      %332 = vmatpush1.msra.mxu0 %v266
      %333 = vmatprep.subr.mxu0 %v252
      %334 = vmatpush1.msra.mxu0 %v251
      %335 = vmatprep.subr.mxu0 %v237
      %336 = vmatpush1.msra.mxu0 %v236
      %337 = vmatprep.subr.mxu0 %v222
      %338 = vmatpush1.msra.mxu0 %v221
      %339 = vmatprep.subr.mxu0 %v207
      %340 = vmatpush1.msra.mxu0 %v206
      %341 = vmatprep.subr.mxu0 %v192
      %342 = vmatpush1.msra.mxu0 %v191
      %343 = vmatprep.subr.mxu0 %v172
      %344 = vmatpush1.msra.mxu0 %v171
      %345 = vmatprep.subr.mxu0 0.0
      %346 = vmatpush2.msra.mxu0 0.0
      %347 = vmatprep.subr.mxu0 0.0
      %348 = vmatpush2.msra.mxu0 0.0
      %349 = vmatprep.subr.mxu0 0.0
      %350 = vmatpush2.msra.mxu0 0.0
      %351 = vmatprep.subr.mxu0 0.0
      %352 = vmatpush2.msra.mxu0 0.0
      %353 = vmatprep.subr.mxu0 0.0
      %354 = vmatpush2.msra.mxu0 0.0
      %355 = vmatprep.subr.mxu0 0.0
      %356 = vmatpush2.msra.mxu0 0.0
      %357 = vmatprep.subr.mxu0 0.0
      %358 = vmatpush2.msra.mxu0 0.0
      %359 = vmatprep.subr.mxu0 0.0
      %360 = vmatpush2.msra.mxu0 0.0
      %361 = vmatprep.subr.mxu0 0.0
      %362 = vmatpush2.msra.mxu0 0.0
      %363 = vmatprep.subr.mxu0 0.0
      %364 = vmatpush2.msra.mxu0 0.0
      %365 = vmatprep.subr.mxu0 0.0
      %366 = vmatpush2.msra.mxu0 0.0
      %367 = vmatprep.subr.mxu0 0.0
      %368 = vmatpush2.msra.mxu0 0.0
      %369 = vmatprep.subr.mxu0 0.0
      %370 = vmatpush2.msra.mxu0 0.0
      %371 = vmatprep.subr.mxu0 0.0
      %372 = vmatpush2.msra.mxu0 0.0
      %373 = vmatprep.subr.mxu0 0.0
      %374 = vmatpush2.msra.mxu0 0.0
      %375 = vmatprep.subr.mxu0 0.0
      %376 = vmatpush2.msra.mxu0 0.0
      %377 = vmatprep.mubr.f32.mxu0 0.0
      %378 = vmatmul.mubr.f32.gmra.mxu0 %v311
      %v379 = vpop.f32.mrf.mxu0
      %v380 = vadd.f32 %v307, %v379
      %v381 = vpop.f32.mrf.mxu0
      %v382 = vadd.f32 %v307, %v381
      %383 = vdwg.mxu0
      %384 = vmatprep.subr.mxu0 0.0
      %385 = vmatpush1.msra.mxu0 0.0
      %386 = vmatprep.subr.mxu0 0.0
      %387 = vmatpush1.msra.mxu0 0.0
      %388 = vmatprep.subr.mxu0 0.0
      %389 = vmatpush1.msra.mxu0 0.0
      %390 = vmatprep.subr.mxu0 0.0
      %391 = vmatpush1.msra.mxu0 0.0
      %392 = vmatprep.subr.mxu0 0.0
      %393 = vmatpush1.msra.mxu0 0.0
      %394 = vmatprep.subr.mxu0 0.0
      %395 = vmatpush1.msra.mxu0 0.0
      %396 = vmatprep.subr.mxu0 0.0
      %397 = vmatpush1.msra.mxu0 0.0
      %398 = vmatprep.subr.mxu0 0.0
      %399 = vmatpush1.msra.mxu0 %v298
      %400 = vmatprep.subr.mxu0 0.0
      %401 = vmatpush1.msra.mxu0 %v283
      %402 = vmatprep.subr.mxu0 0.0
      %403 = vmatpush1.msra.mxu0 %v268
      %404 = vmatprep.subr.mxu0 0.0
      %405 = vmatpush1.msra.mxu0 %v253
      %406 = vmatprep.subr.mxu0 0.0
      %407 = vmatpush1.msra.mxu0 %v238
      %408 = vmatprep.subr.mxu0 0.0
      %409 = vmatpush1.msra.mxu0 %v223
      %410 = vmatprep.subr.mxu0 0.0
      %411 = vmatpush1.msra.mxu0 %v208
      %412 = vmatprep.subr.mxu0 0.0
      %413 = vmatpush1.msra.mxu0 %v193
      %414 = vmatprep.subr.mxu0 0.0
      %415 = vmatpush1.msra.mxu0 %v173
      %416 = vmatprep.subr.mxu0 0.0
      %417 = vmatpush2.msra.mxu0 0.0
      %418 = vmatprep.subr.mxu0 0.0
      %419 = vmatpush2.msra.mxu0 0.0
      %420 = vmatprep.subr.mxu0 0.0
      %421 = vmatpush2.msra.mxu0 0.0
      %422 = vmatprep.subr.mxu0 0.0
      %423 = vmatpush2.msra.mxu0 0.0
      %424 = vmatprep.subr.mxu0 0.0
      %425 = vmatpush2.msra.mxu0 0.0
      %426 = vmatprep.subr.mxu0 0.0
      %427 = vmatpush2.msra.mxu0 0.0
      %428 = vmatprep.subr.mxu0 0.0
      %429 = vmatpush2.msra.mxu0 0.0
      %430 = vmatprep.subr.mxu0 0.0
      %431 = vmatpush2.msra.mxu0 0.0
      %432 = vmatprep.subr.mxu0 0.0
      %433 = vmatpush2.msra.mxu0 0.0
      %434 = vmatprep.subr.mxu0 0.0
      %435 = vmatpush2.msra.mxu0 0.0
      %436 = vmatprep.subr.mxu0 0.0
      %437 = vmatpush2.msra.mxu0 0.0
      %438 = vmatprep.subr.mxu0 0.0
      %439 = vmatpush2.msra.mxu0 0.0
      %440 = vmatprep.subr.mxu0 0.0
      %441 = vmatpush2.msra.mxu0 0.0
      %442 = vmatprep.subr.mxu0 0.0
      %443 = vmatpush2.msra.mxu0 0.0
      %444 = vmatprep.subr.mxu0 0.0
      %445 = vmatpush2.msra.mxu0 0.0
      %446 = vmatprep.subr.mxu0 0.0
      %447 = vmatpush2.msra.mxu0 0.0
      %448 = vmatprep.mubr.f32.mxu0 0.0
      %449 = vmatmul.mubr.f32.gmra.mxu0 %v311
      %v450 = vpop.f32.mrf.mxu0
      %v451 = vadd.f32 %v307, %v450
      %v452 = vpop.f32.mrf.mxu0
      %453 = vdwg.mxu0
      %v454 = vmul.f32 %v380, 0.1
      %v455 = vmul.f32 %v382, 0.1
      %v456 = vmul.f32 %v451, 0.1
      %v457 = vmax.f32 %v380, %v454
      %v458 = vmax.f32 %v382, %v455
      %v459 = vmax.f32 %v451, %v456
      %460 = vst [vmem:[%s170] sm:$0xff] %v457
      %461 = vst [vmem:[%s170 + $0x8] sm:$0xff] %v458
      %462 = vst [vmem:[%s170 + $0x10] sm:$0xff] %v459
      %p463 = scmp.lt.s32.totalorder %s14, 1
      %s464 = scalar_select %p463, %s14, 1
      %s465 = smul.addr %s464, 3
      %s466 = smul.addr %s465, 8
      %s467 = scalar_lea.vmem %s3, %s466
      // Predicated region
      $region33: #{basic_conv_forward.1} parent=31 // pred_check
        %p468 = pneg %p100
      $region34: #{basic_conv_forward.1} parent=31 // pred_check_branch
        %470 = sbr.rel (%p468) target = $region36
      $region35: #{basic_conv_forward.1} parent=31 // pred_region
        _
      $region36: #{basic_conv_forward.1} parent=31 // pred_fallthru
        _
    $region32: #{basic_conv_forward.1} parent=5 // pred_fallthru
      _
    %p471 = scmp.le.s32.totalorder 2, %s9
    // Predicated region
    $region37: #{basic_conv_forward.1} parent=5 // pred_check
      %p472 = pneg %p471
    $region38: #{basic_conv_forward.1} parent=5 // pred_check_branch
      %474 = sbr.rel (%p472) target = $region40
    $region39: #{basic_conv_forward.1} parent=5 // pred_region
      %s475 = ssub.s32 %s9, 2
      // Predicated region
      $region41: #{basic_conv_forward.1} parent=39 // pred_check
        %p476 = pneg %p106
      $region42: #{basic_conv_forward.1} parent=39 // pred_check_branch
        %478 = sbr.rel (%p476) target = $region44
      $region43: #{basic_conv_forward.1} parent=39 // pred_region
        %p479 = scmp.lt.s32.totalorder %s15, 1
        %s480 = scalar_select %p479, %s15, 1
        %s481 = smul.addr %s480, 3
        %s482 = smul.addr %s481, 8
        %s483 = scalar_lea.vmem %s3, %s482
      $region44: #{basic_conv_forward.1} parent=39 // pred_fallthru
        _
    $region40: #{basic_conv_forward.1} parent=5 // pred_fallthru
      _
  $region6: #{basic_conv_forward.1} parent=0 // loop_footer
    %s13 = sadd.s32 1, %s9
  $region7: #{basic_conv_forward.1} parent=0 // loop_footer_branch
    %8 = sbr.rel target = $region3
  $region8: #{basic_conv_forward.1} parent=0 // loop_exit
    _

</llo_original>
